<compile_context>
chip_gen: v7x
topology: tpu7x:2x2x1
jax: 0.10.0
libtpu: 0.0.40
codegen_flags: <defaults>
</compile_context>

<pallas_src>
import functools

import numpy as np
import jax
import jax.numpy as jnp
from jax.experimental import pallas as pl
from jax.experimental.pallas import tpu as pltpu

# pytorch3d defaults: BlendParams(sigma=1e-4, gamma=1e-4, background_color=(1,1,1)),
# cameras znear=1.0 / zfar=100.0.  No learnable parameters in this module.
SIGMA = 1e-4
GAMMA = 1e-4
BACKGROUND = (1.0, 1.0, 1.0)
ZNEAR = 1.0
ZFAR = 100.0
EPS = 1e-10
_MASKED_DIST = 1e8          # sigmoid(-1e8/sigma) == 0 exactly -> replaces the mask plane


def _round_up(x, m):
    return (x + m - 1) // m * m


def _world_normal_shader_kernel(x_ref, out_ref, *, K, inv_sigma, inv_gamma, background):
    # x_ref: (5, K, TP); channels = [nx, ny, nz, z_inv (pre-masked), dists (masked->BIG)]
    nx = x_ref[0]
    ny = x_ref[1]
    nz = x_ref[2]
    z_inv = x_ref[3]
    dists = x_ref[4]

    # ---- world_normal_shading tail: L2-normalize interpolated normals -> RGB ----
    inv_len = jax.lax.rsqrt(nx * nx + ny * ny + nz * nz + 1e-12)
    nr = nx * inv_len
    ng = ny * inv_len
    nb = nz * inv_len

    # ---- softmax_rgb_blend (pytorch3d semantics); divides folded to multiplies ----
    prob = jax.nn.sigmoid(dists * (-inv_sigma))           # masked faces -> exactly 0
    keep = 1.0 - prob
    # NOTE: a mul-reduction (jnp.prod) over the sublane axis has no Mosaic lowering;
    # K is tiny, so a short unrolled product is fine for this HBM-bound kernel.
    prod = keep[0:1]
    for k in range(1, K):
        prod = prod * keep[k:k + 1]
    alpha = 1.0 - prod                                     # (1, TP)

    z_inv_max = jnp.maximum(jnp.max(z_inv, axis=0, keepdims=True), EPS)
    w = prob * jnp.exp((z_inv - z_inv_max) * inv_gamma)    # (K, TP)
    delta = jnp.maximum(jnp.exp((EPS - z_inv_max) * inv_gamma), EPS)
    denom = jnp.sum(w, axis=0, keepdims=True) + delta
    inv_denom = pl.reciprocal(denom, approx=True)

    out_ref[0:1, :] = (jnp.sum(w * nr, axis=0, keepdims=True)
                       + delta * background[0]) * inv_denom
    out_ref[1:2, :] = (jnp.sum(w * ng, axis=0, keepdims=True)
                       + delta * background[1]) * inv_denom
    out_ref[2:3, :] = (jnp.sum(w * nb, axis=0, keepdims=True)
                       + delta * background[2]) * inv_denom
    out_ref[3:4, :] = alpha


def world_normal_shader(pix_to_face, bary_coords, zbuf, dists, faces, verts_normals,
                        *, sigma=SIGMA, gamma=GAMMA, background=BACKGROUND,
                        znear=ZNEAR, zfar=ZFAR, tile_p=8192):
    N, H, W, K = pix_to_face.shape
    P = N * H * W

    # --- wrapper-side glue (fuses in XLA): gather + 3-wide barycentric contraction ---
    p2f = pix_to_face.reshape(P, K)
    mask = p2f >= 0
    idx = jnp.maximum(p2f, 0)                              # clamp -1 -> 0 (masked anyway)
    face_vn = verts_normals[faces]                         # (F, 3 verts, 3 chan)
    vn = face_vn[idx]                                      # (P, K, 3, 3)
    pix_n = jnp.einsum('pkv,pkvc->ckp',
                       bary_coords.reshape(P, K, 3).astype(jnp.float32),
                       vn.astype(jnp.float32))             # (3, K, P) unnormalized normals

    maskf = mask.astype(jnp.float32).T                                        # (K, P)
    z_inv = ((zfar - zbuf.reshape(P, K).astype(jnp.float32))
             / (zfar - znear)).T * maskf                                      # (K, P)
    dists_eff = jnp.where(mask, dists.reshape(P, K).astype(jnp.float32),
                          _MASKED_DIST).T                                     # (K, P)

    x = jnp.concatenate([pix_n, z_inv[None], dists_eff[None]], axis=0)        # (5, K, P)

    # --- tile selection: biggest lane tile that keeps the double-buffered block small
    #     vs scoped VMEM on every generation, with >= 2 grid steps for v7x's 2 cores ---
    p_lanes = _round_up(P, 128)
    vmem_cap_tile = max(128, (4 * 1024 * 1024 // (5 * K * 4)) // 128 * 128)
    tile_p = min(tile_p, vmem_cap_tile, p_lanes)
    if tile_p >= p_lanes and p_lanes >= 256:
        tile_p = _round_up(p_lanes // 2, 128)
    P_pad = _round_up(P, tile_p)
    if P_pad != P:
        x = jnp.pad(x, ((0, 0), (0, 0), (0, P_pad - P)))   # padded pixels sliced off below

    kernel = functools.partial(
        _world_normal_shader_kernel, K=K,
        inv_sigma=float(1.0 / sigma), inv_gamma=float(1.0 / gamma),
        background=tuple(float(b) for b in background))

    out = pl.pallas_call(
        kernel,
        out_shape=jax.ShapeDtypeStruct((4, P_pad), jnp.float32),
        grid_spec=pltpu.PrefetchScalarGridSpec(
            num_scalar_prefetch=0,
            grid=(P_pad // tile_p,),
            in_specs=[pl.BlockSpec((5, K, tile_p), lambda i: (0, 0, i))],
            out_specs=pl.BlockSpec((4, tile_p), lambda i: (0, i)),
        ),
        compiler_params=pltpu.CompilerParams(
            dimension_semantics=("parallel",)),
    )(x)

    images = jnp.transpose(out[:, :P], (1, 0)).reshape(N, H, W, 4)
    return images


def reference_jax(pix_to_face, bary, zbuf, dists, faces, verts_normals,
                  sigma=SIGMA, gamma=GAMMA, background=BACKGROUND,
                  znear=ZNEAR, zfar=ZFAR):
    """Pure-JAX reference mirroring pytorch3d world_normal_shading + softmax_rgb_blend."""
    mask = (pix_to_face >= 0).astype(jnp.float32)
    idx = jnp.maximum(pix_to_face, 0)
    face_vn = verts_normals[faces]
    vn = face_vn[idx]                                          # (N,H,W,K,3,3)
    pix_n = jnp.sum(bary[..., :, None] * vn, axis=-2)          # (N,H,W,K,3)
    pix_n = pix_n * jax.lax.rsqrt(jnp.sum(pix_n * pix_n, -1, keepdims=True) + 1e-12)

    prob = jax.nn.sigmoid(-dists / sigma) * mask
    alpha = 1.0 - jnp.prod(1.0 - prob, axis=-1)
    z_inv = (zfar - zbuf) / (zfar - znear) * mask
    z_inv_max = jnp.maximum(jnp.max(z_inv, -1, keepdims=True), EPS)
    w = prob * jnp.exp((z_inv - z_inv_max) / gamma)
    delta = jnp.maximum(jnp.exp((EPS - z_inv_max) / gamma), EPS)
    denom = jnp.sum(w, -1, keepdims=True) + delta
    bg = jnp.asarray(background, dtype=jnp.float32)
    rgb = (jnp.sum(w[..., None] * pix_n, axis=-2) + delta * bg) / denom
    return jnp.concatenate([rgb, alpha[..., None]], axis=-1)


if __name__ == "__main__":
    # Small synthetic "fragments" + "meshes" (deterministic).
    N, H, W, K = 2, 16, 16, 4
    V, F = 24, 32

    key = jax.random.PRNGKey(0)
    k1, k2, k3, k4, k5, k6 = jax.random.split(key, 6)

    verts_normals = jax.random.normal(k1, (V, 3), dtype=jnp.float32)
    verts_normals = verts_normals / jnp.linalg.norm(verts_normals, axis=-1, keepdims=True)
    faces = jax.random.randint(k2, (F, 3), 0, V, dtype=jnp.int32)

    pix_to_face = jax.random.randint(k3, (N, H, W, K), -1, F, dtype=jnp.int32)  # -1 = bg
    bary = jax.random.uniform(k4, (N, H, W, K, 3), minval=1e-3, maxval=1.0,
                              dtype=jnp.float32)
    bary = bary / jnp.sum(bary, axis=-1, keepdims=True)
    zbuf = jax.random.uniform(k5, (N, H, W, K), minval=ZNEAR, maxval=ZFAR,
                              dtype=jnp.float32)
    dists = jax.random.uniform(k6, (N, H, W, K), minval=-1e-3, maxval=1e-3,
                               dtype=jnp.float32)

    images = world_normal_shader(pix_to_face, bary, zbuf, dists, faces, verts_normals)
    images = jax.block_until_ready(images)

    ref = reference_jax(pix_to_face, bary, zbuf, dists, faces, verts_normals)
    # Tolerance loosened from 1e-5: pl.reciprocal(approx=True) + folded 1/sigma, 1/gamma
    # constants introduce ~1e-3-level differences vs the exact-divide reference.
    np.testing.assert_allclose(np.asarray(images), np.asarray(ref),
                               rtol=1e-2, atol=1e-2)

    print("KERNEL_OK")
</pallas_src>

<mosaic_0001>
module attributes {stable_mosaic.version = 11 : i64} {
  func.func @_world_normal_shader_kernel(%arg0: i32, %arg1: memref<5x4x256xf32, #tpu.memory_space<vmem>>, %arg2: memref<4x256xf32, #tpu.memory_space<vmem>>) attributes {dimension_semantics = [#tpu.dimension_semantics<parallel>], iteration_bounds = array<i64: 2>, scalar_prefetch = 0 : i64, scratch_operands = 0 : i64, tpu.core_type = #tpu.core_type<tc>, window_params = [{transform_indices = @transform_0, window_bounds = array<i64: 5, 4, 256>}, {transform_indices = @transform_1, window_bounds = array<i64: 4, 256>}]} {
    %c0 = arith.constant 0 : index
    %c0_0 = arith.constant 0 : index
    %c0_1 = arith.constant 0 : index
    %0 = vector.load %arg1[%c0, %c0_0, %c0_1] : memref<5x4x256xf32, #tpu.memory_space<vmem>>, vector<1x4x256xf32>
    %1 = vector.shape_cast %0 : vector<1x4x256xf32> to vector<4x256xf32>
    %c1 = arith.constant 1 : index
    %c0_2 = arith.constant 0 : index
    %c0_3 = arith.constant 0 : index
    %2 = vector.load %arg1[%c1, %c0_2, %c0_3] : memref<5x4x256xf32, #tpu.memory_space<vmem>>, vector<1x4x256xf32>
    %3 = vector.shape_cast %2 : vector<1x4x256xf32> to vector<4x256xf32>
    %c2 = arith.constant 2 : index
    %c0_4 = arith.constant 0 : index
    %c0_5 = arith.constant 0 : index
    %4 = vector.load %arg1[%c2, %c0_4, %c0_5] : memref<5x4x256xf32, #tpu.memory_space<vmem>>, vector<1x4x256xf32>
    %5 = vector.shape_cast %4 : vector<1x4x256xf32> to vector<4x256xf32>
    %c3 = arith.constant 3 : index
    %c0_6 = arith.constant 0 : index
    %c0_7 = arith.constant 0 : index
    %6 = vector.load %arg1[%c3, %c0_6, %c0_7] : memref<5x4x256xf32, #tpu.memory_space<vmem>>, vector<1x4x256xf32>
    %7 = vector.shape_cast %6 : vector<1x4x256xf32> to vector<4x256xf32>
    %c4 = arith.constant 4 : index
    %c0_8 = arith.constant 0 : index
    %c0_9 = arith.constant 0 : index
    %8 = vector.load %arg1[%c4, %c0_8, %c0_9] : memref<5x4x256xf32, #tpu.memory_space<vmem>>, vector<1x4x256xf32>
    %9 = vector.shape_cast %8 : vector<1x4x256xf32> to vector<4x256xf32>
    %10 = arith.mulf %1, %1 : vector<4x256xf32>
    %11 = arith.mulf %3, %3 : vector<4x256xf32>
    %12 = arith.addf %10, %11 : vector<4x256xf32>
    %13 = arith.mulf %5, %5 : vector<4x256xf32>
    %14 = arith.addf %12, %13 : vector<4x256xf32>
    %cst = arith.constant 9.99999996E-13 : f32
    %15 = vector.broadcast %cst : f32 to vector<4x256xf32>
    %16 = arith.addf %14, %15 : vector<4x256xf32>
    %17 = math.rsqrt %16 : vector<4x256xf32>
    %18 = arith.mulf %1, %17 : vector<4x256xf32>
    %19 = arith.mulf %3, %17 : vector<4x256xf32>
    %20 = arith.mulf %5, %17 : vector<4x256xf32>
    %cst_10 = arith.constant -1.000000e+04 : f32
    %21 = vector.broadcast %cst_10 : f32 to vector<4x256xf32>
    %22 = arith.mulf %9, %21 : vector<4x256xf32>
    %23 = arith.negf %22 : vector<4x256xf32>
    %24 = math.exp %23 : vector<4x256xf32>
    %cst_11 = arith.constant 1.000000e+00 : f32
    %25 = vector.broadcast %cst_11 : f32 to vector<4x256xf32>
    %26 = arith.addf %25, %24 : vector<4x256xf32>
    %27 = arith.divf %25, %26 : vector<4x256xf32>
    %cst_12 = arith.constant 1.000000e+00 : f32
    %28 = vector.broadcast %cst_12 : f32 to vector<4x256xf32>
    %29 = arith.subf %28, %27 : vector<4x256xf32>
    %30 = vector.extract_strided_slice %29 {offsets = [0, 0], sizes = [1, 256], strides = [1, 1]} : vector<4x256xf32> to vector<1x256xf32>
    %31 = vector.extract_strided_slice %29 {offsets = [1, 0], sizes = [1, 256], strides = [1, 1]} : vector<4x256xf32> to vector<1x256xf32>
    %32 = arith.mulf %30, %31 : vector<1x256xf32>
    %33 = vector.extract_strided_slice %29 {offsets = [2, 0], sizes = [1, 256], strides = [1, 1]} : vector<4x256xf32> to vector<1x256xf32>
    %34 = arith.mulf %32, %33 : vector<1x256xf32>
    %35 = vector.extract_strided_slice %29 {offsets = [3, 0], sizes = [1, 256], strides = [1, 1]} : vector<4x256xf32> to vector<1x256xf32>
    %36 = arith.mulf %34, %35 : vector<1x256xf32>
    %cst_13 = arith.constant 1.000000e+00 : f32
    %37 = vector.broadcast %cst_13 : f32 to vector<1x256xf32>
    %38 = arith.subf %37, %36 : vector<1x256xf32>
    %cst_14 = arith.constant dense<0xFF800000> : vector<256xf32>
    %39 = vector.multi_reduction <maximumf>, %7, %cst_14 [0] : vector<4x256xf32> to vector<256xf32>
    %40 = vector.shape_cast %39 : vector<256xf32> to vector<1x256xf32>
    %cst_15 = arith.constant 1.000000e-10 : f32
    %41 = vector.broadcast %cst_15 : f32 to vector<1x256xf32>
    %42 = arith.maximumf %40, %41 : vector<1x256xf32>
    %43 = vector.broadcast %42 : vector<1x256xf32> to vector<4x256xf32>
    %44 = arith.subf %7, %43 : vector<4x256xf32>
    %cst_16 = arith.constant 1.000000e+04 : f32
    %45 = vector.broadcast %cst_16 : f32 to vector<4x256xf32>
    %46 = arith.mulf %44, %45 : vector<4x256xf32>
    %47 = math.exp %46 : vector<4x256xf32>
    %48 = arith.mulf %27, %47 : vector<4x256xf32>
    %cst_17 = arith.constant 1.000000e-10 : f32
    %49 = vector.broadcast %cst_17 : f32 to vector<1x256xf32>
    %50 = arith.subf %49, %42 : vector<1x256xf32>
    %cst_18 = arith.constant 1.000000e+04 : f32
    %51 = vector.broadcast %cst_18 : f32 to vector<1x256xf32>
    %52 = arith.mulf %50, %51 : vector<1x256xf32>
    %53 = math.exp %52 : vector<1x256xf32>
    %cst_19 = arith.constant 1.000000e-10 : f32
    %54 = vector.broadcast %cst_19 : f32 to vector<1x256xf32>
    %55 = arith.maximumf %53, %54 : vector<1x256xf32>
    %cst_20 = arith.constant dense<0.000000e+00> : vector<256xf32>
    %56 = vector.multi_reduction <add>, %48, %cst_20 [0] : vector<4x256xf32> to vector<256xf32>
    %57 = vector.shape_cast %56 : vector<256xf32> to vector<1x256xf32>
    %58 = arith.addf %57, %55 : vector<1x256xf32>
    %59 = tpu.reciprocal %58 {approx = true} : vector<1x256xf32> -> vector<1x256xf32>
    %60 = arith.mulf %48, %18 : vector<4x256xf32>
    %cst_21 = arith.constant dense<0.000000e+00> : vector<256xf32>
    %61 = vector.multi_reduction <add>, %60, %cst_21 [0] : vector<4x256xf32> to vector<256xf32>
    %62 = vector.shape_cast %61 : vector<256xf32> to vector<1x256xf32>
    %cst_22 = arith.constant 1.000000e+00 : f32
    %63 = vector.broadcast %cst_22 : f32 to vector<1x256xf32>
    %64 = arith.mulf %55, %63 : vector<1x256xf32>
    %65 = arith.addf %62, %64 : vector<1x256xf32>
    %66 = arith.mulf %65, %59 : vector<1x256xf32>
    %c0_23 = arith.constant 0 : index
    %c0_24 = arith.constant 0 : index
    %67 = vector.load %arg2[%c0_23, %c0_24] : memref<4x256xf32, #tpu.memory_space<vmem>>, vector<1x256xf32>
    tpu.vector_store %arg2[%c0_23, %c0_24], %66 {strides = array<i32>} : memref<4x256xf32, #tpu.memory_space<vmem>>, vector<1x256xf32>,
    %68 = arith.mulf %48, %19 : vector<4x256xf32>
    %cst_25 = arith.constant dense<0.000000e+00> : vector<256xf32>
    %69 = vector.multi_reduction <add>, %68, %cst_25 [0] : vector<4x256xf32> to vector<256xf32>
    %70 = vector.shape_cast %69 : vector<256xf32> to vector<1x256xf32>
    %cst_26 = arith.constant 1.000000e+00 : f32
    %71 = vector.broadcast %cst_26 : f32 to vector<1x256xf32>
    %72 = arith.mulf %55, %71 : vector<1x256xf32>
    %73 = arith.addf %70, %72 : vector<1x256xf32>
    %74 = arith.mulf %73, %59 : vector<1x256xf32>
    %c1_27 = arith.constant 1 : index
    %c0_28 = arith.constant 0 : index
    %75 = vector.load %arg2[%c1_27, %c0_28] : memref<4x256xf32, #tpu.memory_space<vmem>>, vector<1x256xf32>
    tpu.vector_store %arg2[%c1_27, %c0_28], %74 {strides = array<i32>} : memref<4x256xf32, #tpu.memory_space<vmem>>, vector<1x256xf32>,
    %76 = arith.mulf %48, %20 : vector<4x256xf32>
    %cst_29 = arith.constant dense<0.000000e+00> : vector<256xf32>
    %77 = vector.multi_reduction <add>, %76, %cst_29 [0] : vector<4x256xf32> to vector<256xf32>
    %78 = vector.shape_cast %77 : vector<256xf32> to vector<1x256xf32>
    %cst_30 = arith.constant 1.000000e+00 : f32
    %79 = vector.broadcast %cst_30 : f32 to vector<1x256xf32>
    %80 = arith.mulf %55, %79 : vector<1x256xf32>
    %81 = arith.addf %78, %80 : vector<1x256xf32>
    %82 = arith.mulf %81, %59 : vector<1x256xf32>
    %c2_31 = arith.constant 2 : index
    %c0_32 = arith.constant 0 : index
    %83 = vector.load %arg2[%c2_31, %c0_32] : memref<4x256xf32, #tpu.memory_space<vmem>>, vector<1x256xf32>
    tpu.vector_store %arg2[%c2_31, %c0_32], %82 {strides = array<i32>} : memref<4x256xf32, #tpu.memory_space<vmem>>, vector<1x256xf32>,
    %c3_33 = arith.constant 3 : index
    %c0_34 = arith.constant 0 : index
    %84 = vector.load %arg2[%c3_33, %c0_34] : memref<4x256xf32, #tpu.memory_space<vmem>>, vector<1x256xf32>
    tpu.vector_store %arg2[%c3_33, %c0_34], %38 {strides = array<i32>} : memref<4x256xf32, #tpu.memory_space<vmem>>, vector<1x256xf32>,
    return
  }
  func.func @transform_0(%arg0: i32) -> (i32, i32, i32) {
    %c0_i32 = arith.constant 0 : i32
    %c0_i32_0 = arith.constant 0 : i32
    %c0_i32_1 = arith.constant 0 : i32
    return %c0_i32, %c0_i32_0, %arg0 : i32, i32, i32
  }
  func.func @transform_1(%arg0: i32) -> (i32, i32) {
    %c0_i32 = arith.constant 0 : i32
    %c0_i32_0 = arith.constant 0 : i32
    return %c0_i32, %arg0 : i32, i32
  }
}

</mosaic_0001>

<llo_original>
// kernel: tpu_custom_call.1
$region0: #{tpu_custom_call.1}
  #allocation0 [shape = 'u32[]', space=smem, size = 0x4, offset = 0x4, fixed_abs, tag = 'smem constant byte address 0x4 - core index']
  #allocation1 [shape = 'u32[144,128]{1,0:T(1,128)}', space=vmem, size = 0x12000, scoped, tag = 'internal scratch']
  %s0 = inlined_call_operand.hbm [shape: f32[5,4,512], index: 0, kind: input, shape index: {}]
  %s1 = inlined_call_operand.hbm [shape: f32[4,512], index: 1, kind: output, shape index: {}]
  %s2 = sld [smem:[#allocation0]]
  $region41: #{tpu_custom_call.1} parent=0
    _
  %s4 = ssub.s32 1, %s2
  %s5 = scalar_select 0, %s4, %s2
  $region1: #{tpu_custom_call.1} parent=0
    #allocation2 [shape = 'u8[40960]{0}', space=vmem, size = 0xa000, scoped, tag = 'input window, operand 0']
    #allocation3 [shape = 's32[2]{0}', space=sflag, size = 0x8, scoped, tag = 'scoped memory for tpu_custom_call.1']
    #allocation4 [shape = 's32[2]{0}', space=sflag, size = 0x8, scoped, tag = 'scoped memory for tpu_custom_call.1']
    #allocation5 [shape = 'u8[8192]{0}', space=vmem, size = 0x2000, scoped, tag = 'output window, operand 0']
    %6 = vsyncpa [#allocation3], 0
    %s7 = scalar_lea.sflag [#allocation3], 1
    %8 = vsyncpa %s7, 0
    %9 = vsyncpa [#allocation4], 0
    %s10 = scalar_lea.sflag [#allocation4], 1
    %11 = vsyncpa %s10, 0
    loop: start=0, step=1, limit=4
    $region2: #{tpu_custom_call.1} parent=1 // loop_pre_header
      _
    $region3: #{tpu_custom_call.1} parent=1 // loop_header
      %s13 = sphi 0, %s17
      %p14 = scmp.ge.s32.totalorder %s13, 4
      %s23 = sphi 0, %s25
      %s26 = sphi 0, %s23
      %s27 = sphi 0, %s26
      %s43 = sphi 0, %s27
      %s49 = sphi 0, %s51
      %s52 = sphi 0, %s49
      %s53 = sphi 0, %s52
      %s69 = sphi 0, %s53
    $region4: #{tpu_custom_call.1} parent=1 // loop_header_branch
      %16 = sbr.rel (%p14) target = $region8
    $region5: #{tpu_custom_call.1} parent=1 // loop_body
      %s18 = ssub.s32 %s13, 1
      %s19 = ssub.s32 %s13, 2
      %s20 = sadd.s32 %s13, 1
      %s21 = ssub.s32 %s13, %s20
      %p22 = scmp.eq.s32.totalorder %s21, 0
      %s24 = sadd.s32 %s23, 1
      %s25 = scalar_select %p22, %s23, %s24
      %p28 = pneg %p22
      %p29 = scmp.eq.s32.totalorder %s13, 1
      %p30 = por %p28, %p29
      %p31 = scmp.ne.s32.totalorder %s23, %s26
      %p32 = scmp.eq.s32.totalorder %s13, 0
      %p33 = por %p31, %p32
      %p34 = scmp.ne.s32.totalorder %s23, %s26
      %p35 = scmp.eq.s32.totalorder %s18, 1
      %p36 = por %p34, %p35
      %p37 = scmp.ne.s32.totalorder %s26, %s27
      %p38 = scmp.eq.s32.totalorder %s18, 0
      %p39 = por %p37, %p38
      %p40 = scmp.ne.s32.totalorder %s26, %s27
      %p41 = scmp.eq.s32.totalorder %s19, 1
      %p42 = por %p40, %p41
      %p44 = scmp.ne.s32.totalorder %s27, %s43
      %p45 = scmp.eq.s32.totalorder %s19, 0
      %p46 = por %p44, %p45
      %s47 = ssub.s32 %s13, %s20
      %p48 = scmp.eq.s32.totalorder %s47, 0
      %s50 = sadd.s32 %s49, 1
      %s51 = scalar_select %p48, %s49, %s50
      %p54 = pneg %p48
      %p55 = scmp.eq.s32.totalorder %s13, 1
      %p56 = por %p54, %p55
      %p57 = scmp.ne.s32.totalorder %s49, %s52
      %p58 = scmp.eq.s32.totalorder %s13, 0
      %p59 = por %p57, %p58
      %p60 = scmp.ne.s32.totalorder %s49, %s52
      %p61 = scmp.eq.s32.totalorder %s18, 1
      %p62 = por %p60, %p61
      %p63 = scmp.ne.s32.totalorder %s52, %s53
      %p64 = scmp.eq.s32.totalorder %s18, 0
      %p65 = por %p63, %p64
      %p66 = scmp.ne.s32.totalorder %s52, %s53
      %p67 = scmp.eq.s32.totalorder %s19, 1
      %p68 = por %p66, %p67
      %p70 = scmp.ne.s32.totalorder %s53, %s69
      %p71 = scmp.eq.s32.totalorder %s19, 0
      %p72 = por %p70, %p71
      %p73 = scmp.le.s32.totalorder 1, %s13
      %p74 = scmp.lt.s32.totalorder %s13, 3
      %p75 = pnand %p73, %p74
      %p76 = pneg %p75
      // Predicated region
      $region9: #{tpu_custom_call.1} parent=5 // pred_check
        _
      $region10: #{tpu_custom_call.1} parent=5 // pred_check_branch
        %78 = sbr.rel (%p75) target = $region12
      $region11: #{tpu_custom_call.1} parent=5 // pred_region
        %s79 = ssub.s32 %s13, 1
      $region12: #{tpu_custom_call.1} parent=5 // pred_fallthru
        _
      %p80 = scmp.lt.s32.totalorder %s13, 2
      // Predicated region
      $region13: #{tpu_custom_call.1} parent=5 // pred_check
        %p81 = pneg %p80
      $region14: #{tpu_custom_call.1} parent=5 // pred_check_branch
        %83 = sbr.rel (%p81) target = $region16
      $region15: #{tpu_custom_call.1} parent=5 // pred_region
        // Predicated region
        $region17: #{tpu_custom_call.1} parent=15 // pred_check
          %p84 = pneg %p33
        $region18: #{tpu_custom_call.1} parent=15 // pred_check_branch
          %86 = sbr.rel (%p84) target = $region20
        $region19: #{tpu_custom_call.1} parent=15 // pred_region
          %s87 = sand.u32 %s23, 1
          %s88 = scalar_lea.sflag [#allocation3], %s87
          %s89 = sand.u32 %s23, 1
          %s90 = smul.addr %s89, 40
          %s91 = scalar_lea.vmem [#allocation2], %s90
          %s92 = smul.u32 2, %s13
          %s94 = ssub.s32 640, 640
          %95 = vsyncadd %s88, %s94
          %s96 = smul.addr %s92, 64
          %s97 = scalar_lea.hbm %s0, %s96
          %s98 = sshll.u32 %s91, 4
          %s99 = int_to_ptr.vmem [resolvable:$true] %s98
          %104 = dma.hbm_to_vmem [thread:$0]  %s97, 640, %s99, %s88, 256, 128, 8
        $region20: #{tpu_custom_call.1} parent=15 // pred_fallthru
          _
      $region16: #{tpu_custom_call.1} parent=5 // pred_fallthru
        _
      %p105 = scmp.le.s32.totalorder 1, %s13
      %p106 = scmp.lt.s32.totalorder %s13, 3
      %p107 = pnand %p105, %p106
      %p108 = pneg %p107
      // Predicated region
      $region21: #{tpu_custom_call.1} parent=5 // pred_check
        _
      $region22: #{tpu_custom_call.1} parent=5 // pred_check_branch
        %110 = sbr.rel (%p107) target = $region24
      $region23: #{tpu_custom_call.1} parent=5 // pred_region
        %s111 = ssub.s32 %s13, 1
        %s112 = sand.u32 %s26, 1
        %s113 = scalar_lea.sflag [#allocation3], %s112
        %s114 = sand.u32 %s26, 1
        %s115 = smul.addr %s114, 40
        %s116 = scalar_lea.vmem [#allocation2], %s115
        // Predicated region
        $region25: #{tpu_custom_call.1} parent=23 // pred_check
          %p117 = pneg %p39
        $region26: #{tpu_custom_call.1} parent=23 // pred_check_branch
          %119 = sbr.rel (%p117) target = $region28
        $region27: #{tpu_custom_call.1} parent=23 // pred_region
          %120 = dma.done %s113, 640
        $region28: #{tpu_custom_call.1} parent=23 // pred_fallthru
          _
        %s121 = sand.u32 %s26, 1
        %s122 = scalar_lea.sflag [#allocation3], %s121
        %s123 = sand.u32 %s26, 1
        %s124 = smul.addr %s123, 40
        %s125 = scalar_lea.vmem [#allocation2], %s124
        %p126 = pneg %p39
        %p127 = pneg %p36
        %p128 = pneg %p65
        %p129 = pneg %p62
        %s130 = sand.u32 %s52, 1
        %s131 = scalar_lea.sflag [#allocation4], %s130
        %s132 = sand.u32 %s52, 1
        %s133 = smul.addr %s132, 8
        %s134 = scalar_lea.vmem [#allocation5], %s133
        %s135 = smul.u32 2, %s18
        %s136 = smul.u32 2, %s18
        %v137 = vld [vmem:[%s116] sm:$0xff]
        %s138 = scalar_lea.vmem %s116, 8 [#allocation2]
        %v139 = vld [vmem:[%s138] sm:$0xff]
        %s140 = scalar_lea.vmem %s116, 16 [#allocation2]
        %v141 = vld [vmem:[%s140] sm:$0xff]
        %s142 = scalar_lea.vmem %s116, 24 [#allocation2]
        %v143 = vld [vmem:[%s142] sm:$0xff]
        %s144 = scalar_lea.vmem %s116, 32 [#allocation2]
        %v145 = vld [vmem:[%s144] sm:$0xff]
        %v146 = vmul.f32 %v137, %v137
        %v147 = vmul.f32 %v139, %v139
        %v148 = vadd.f32 %v146, %v147
        %v149 = vmul.f32 %v141, %v141
        %v150 = vadd.f32 %v148, %v149
        %v151 = vadd.f32 %v150, 1e-12
        %v152 = vrsqrt.pop %v151
        %v153 = vmul.f32 %v137, %v152
        %v154 = vmul.f32 %v139, %v152
        %v155 = vmul.f32 %v141, %v152
        %v156 = vmul.f32 %v145, -10000.0
        %v157 = vxor.u32 %v156, 2147483648
        %v158 = vmul.f32 %v157, 1.442695
        %v159 = vpow.pop %v158
        %v160 = vadd.f32 %v159, 1.0
        %v161 = vrcp.pop %v160
        %v162 = vmul.f32 1.0, %v161
        %v163 = vsub.f32 1.0, %v162
        %v165 = vrot.slane %v163, 5
        %v166 = vrot.slane %v165, 4
        %v168 = vmul.f32 %v163, %v166
        %v169 = vrot.slane %v163, 6
        %v170 = vrot.slane %v169, 4
        %v172 = vmul.f32 %v168, %v170
        %v173 = vrot.slane %v163, 7
        %v174 = vrot.slane %v173, 4
        %v176 = vmul.f32 %v172, %v174
        %v177 = vsub.f32 1.0, %v176
        %v179 = vcombine.high %v143, %v143
        %vm181 = vcmask 1043456
        %v182 = vsel %vm181, %v143, -inf
        %v183 = vrot.slane %v182, 4
        %v184 = vmax.f32 %v182, %v183
        %v185 = vrot.slane %v184, 2
        %v186 = vmax.f32 %v184, %v185
        %v187 = vrot.slane %v186, 1
        %v188 = vmax.f32 %v186, %v187
        %v189 = vsel %vm181, %v179, -inf
        %v190 = vrot.slane %v189, 4
        %v191 = vmax.f32 %v189, %v190
        %v192 = vrot.slane %v191, 2
        %v193 = vmax.f32 %v191, %v192
        %v194 = vrot.slane %v193, 1
        %v195 = vmax.f32 %v193, %v194
        %v196 = vmax.f32 %v188, 1e-10
        %v197 = vmax.f32 %v195, 1e-10
        %v200 = vcombine.low %v196, %v197
        %v202 = vsub.f32 %v143, %v200
        %v203 = vmul.f32 %v202, 10000.0
        %v204 = vmul.f32 %v203, 1.442695
        %v205 = vpow.pop %v204
        %v206 = vmul.f32 %v162, %v205
        %v207 = vsub.f32 1e-10, %v196
        %v208 = vsub.f32 1e-10, %v197
        %v209 = vmul.f32 %v207, 10000.0
        %v210 = vmul.f32 %v208, 10000.0
        %v211 = vmul.f32 %v209, 1.442695
        %v212 = vpow.pop %v211
        %v213 = vmul.f32 %v210, 1.442695
        %v214 = vpow.pop %v213
        %v215 = vmax.f32 %v212, 1e-10
        %v216 = vmax.f32 %v214, 1e-10
        %v218 = vcombine.high %v206, %v206
        %v220 = vsel %vm181, %v206, 0.0
        %v221 = vrot.slane %v220, 4
        %v222 = vadd.f32 %v220, %v221
        %v223 = vrot.slane %v222, 2
        %v224 = vadd.f32 %v222, %v223
        %v225 = vrot.slane %v224, 1
        %v226 = vadd.f32 %v224, %v225
        %v227 = vsel %vm181, %v218, 0.0
        %v228 = vrot.slane %v227, 4
        %v229 = vadd.f32 %v227, %v228
        %v230 = vrot.slane %v229, 2
        %v231 = vadd.f32 %v229, %v230
        %v232 = vrot.slane %v231, 1
        %v233 = vadd.f32 %v231, %v232
        %v234 = vadd.f32 %v226, %v215
        %v235 = vadd.f32 %v233, %v216
        %v236 = vrcp.pop %v234
        %v237 = vrcp.pop %v235
        %v238 = vmul.f32 %v206, %v153
        %v240 = vcombine.high %v238, %v238
        %v242 = vsel %vm181, %v238, 0.0
        %v243 = vrot.slane %v242, 4
        %v244 = vadd.f32 %v242, %v243
        %v245 = vrot.slane %v244, 2
        %v246 = vadd.f32 %v244, %v245
        %v247 = vrot.slane %v246, 1
        %v248 = vadd.f32 %v246, %v247
        %v249 = vsel %vm181, %v240, 0.0
        %v250 = vrot.slane %v249, 4
        %v251 = vadd.f32 %v249, %v250
        %v252 = vrot.slane %v251, 2
        %v253 = vadd.f32 %v251, %v252
        %v254 = vrot.slane %v253, 1
        %v255 = vadd.f32 %v253, %v254
        %v256 = vadd.f32 %v248, %v215
        %v257 = vadd.f32 %v255, %v216
        %v258 = vmul.f32 %v256, %v236
        %v259 = vmul.f32 %v257, %v237
        %v262 = vcombine.low %v258, %v259
        %v264 = vunpack.c.l.s4 1966171168
        %v265 = vunpack.c.0.s8 %v264
        %v266 = vlaneseq
        %v267 = vshrl.u32 %v266, 7
        %v268 = vsub.s32 %v265, %v267
        %v269 = vrot.slane %v262, %v268
        %v271 = vunpack.c.l.s4 1966171168
        %v272 = vunpack.c.0.s8 %v271
        %v273 = vlaneseq
        %v274 = vshrl.u32 %v273, 7
        %v275 = vsub.s32 %v272, %v274
        %v276 = vrot.slane %v269, %v275
        %v278 = vlaneseq
        %vm279 = vcmp.ge.s32.totalorder %v278, 0
        %vm280 = vcmp.lt.s32.totalorder %v278, 256
        %vm281 = vmand %vm279, %vm280
        %282 = vst.msk [vmem:[%s134] ss:$4 sm:$0x3] %vm281, %v276
        %v283 = vmul.f32 %v206, %v154
        %v285 = vcombine.high %v283, %v283
        %v287 = vsel %vm181, %v283, 0.0
        %v288 = vrot.slane %v287, 4
        %v289 = vadd.f32 %v287, %v288
        %v290 = vrot.slane %v289, 2
        %v291 = vadd.f32 %v289, %v290
        %v292 = vrot.slane %v291, 1
        %v293 = vadd.f32 %v291, %v292
        %v294 = vsel %vm181, %v285, 0.0
        %v295 = vrot.slane %v294, 4
        %v296 = vadd.f32 %v294, %v295
        %v297 = vrot.slane %v296, 2
        %v298 = vadd.f32 %v296, %v297
        %v299 = vrot.slane %v298, 1
        %v300 = vadd.f32 %v298, %v299
        %v301 = vadd.f32 %v293, %v215
        %v302 = vadd.f32 %v300, %v216
        %v303 = vmul.f32 %v301, %v236
        %v304 = vmul.f32 %v302, %v237
        %v307 = vcombine.low %v303, %v304
        %v309 = vunpack.c.l.s4 1966171168
        %v310 = vunpack.c.0.s8 %v309
        %v311 = vlaneseq
        %v312 = vshrl.u32 %v311, 7
        %v313 = vsub.s32 %v310, %v312
        %v314 = vrot.slane %v307, %v313
        %v316 = vunpack.c.l.s4 1966171168
        %v317 = vunpack.c.0.s8 %v316
        %v318 = vlaneseq
        %v319 = vshrl.u32 %v318, 7
        %v320 = vsub.s32 %v317, %v319
        %v321 = vrot.slane %v314, %v320
        %s323 = scalar_lea.vmem %s134, 1 [#allocation5]
        %324 = vst.msk [vmem:[%s323] ss:$4 sm:$0x3] %vm281, %v321
        %v325 = vmul.f32 %v206, %v155
        %v327 = vcombine.high %v325, %v325
        %v329 = vsel %vm181, %v325, 0.0
        %v330 = vrot.slane %v329, 4
        %v331 = vadd.f32 %v329, %v330
        %v332 = vrot.slane %v331, 2
        %v333 = vadd.f32 %v331, %v332
        %v334 = vrot.slane %v333, 1
        %v335 = vadd.f32 %v333, %v334
        %v336 = vsel %vm181, %v327, 0.0
        %v337 = vrot.slane %v336, 4
        %v338 = vadd.f32 %v336, %v337
        %v339 = vrot.slane %v338, 2
        %v340 = vadd.f32 %v338, %v339
        %v341 = vrot.slane %v340, 1
        %v342 = vadd.f32 %v340, %v341
        %v343 = vadd.f32 %v335, %v215
        %v344 = vadd.f32 %v342, %v216
        %v345 = vmul.f32 %v343, %v236
        %v346 = vmul.f32 %v344, %v237
        %v349 = vcombine.low %v345, %v346
        %v351 = vunpack.c.l.s4 1966171168
        %v352 = vunpack.c.0.s8 %v351
        %v353 = vlaneseq
        %v354 = vshrl.u32 %v353, 7
        %v355 = vsub.s32 %v352, %v354
        %v356 = vrot.slane %v349, %v355
        %v358 = vunpack.c.l.s4 1966171168
        %v359 = vunpack.c.0.s8 %v358
        %v360 = vlaneseq
        %v361 = vshrl.u32 %v360, 7
        %v362 = vsub.s32 %v359, %v361
        %v363 = vrot.slane %v356, %v362
        %s365 = scalar_lea.vmem %s134, 2 [#allocation5]
        %366 = vst.msk [vmem:[%s365] ss:$4 sm:$0x3] %vm281, %v363
        %v369 = vunpack.c.l.s4 1966171168
        %v370 = vunpack.c.0.s8 %v369
        %v371 = vlaneseq
        %v372 = vshrl.u32 %v371, 7
        %v373 = vsub.s32 %v370, %v372
        %v374 = vrot.slane %v177, %v373
        %v376 = vunpack.c.l.s4 1966171168
        %v377 = vunpack.c.0.s8 %v376
        %v378 = vlaneseq
        %v379 = vshrl.u32 %v378, 7
        %v380 = vsub.s32 %v377, %v379
        %v381 = vrot.slane %v374, %v380
        %s383 = scalar_lea.vmem %s134, 3 [#allocation5]
        %384 = vst.msk [vmem:[%s383] ss:$4 sm:$0x3] %vm281, %v381
        %s385 = sand.u32 %s52, 1
        %s386 = scalar_lea.sflag [#allocation4], %s385
        %s387 = sand.u32 %s52, 1
        %s388 = smul.addr %s387, 8
        %s389 = scalar_lea.vmem [#allocation5], %s388
        // Predicated region
        $region29: #{tpu_custom_call.1} parent=23 // pred_check
          %p390 = pneg %p62
        $region30: #{tpu_custom_call.1} parent=23 // pred_check_branch
          %392 = sbr.rel (%p390) target = $region32
        $region31: #{tpu_custom_call.1} parent=23 // pred_region
          %s393 = smul.u32 2, %s18
          %s395 = ssub.s32 128, 128
          %396 = vsyncadd %s386, %s395
          %s397 = smul.addr %s393, 64
          %s398 = scalar_lea.hbm %s1, %s397
          %s400 = sshll.u32 %s389, 4
          %s401 = int_to_ptr.vmem [resolvable:$true] %s400
          %403 = dma.vmem_to_hbm [thread:$0]  %s401, 128, %s398, %s386
        $region32: #{tpu_custom_call.1} parent=23 // pred_fallthru
          _
      $region24: #{tpu_custom_call.1} parent=5 // pred_fallthru
        _
      %p404 = scmp.le.s32.totalorder 2, %s13
      // Predicated region
      $region33: #{tpu_custom_call.1} parent=5 // pred_check
        %p405 = pneg %p404
      $region34: #{tpu_custom_call.1} parent=5 // pred_check_branch
        %407 = sbr.rel (%p405) target = $region36
      $region35: #{tpu_custom_call.1} parent=5 // pred_region
        %s408 = ssub.s32 %s13, 2
        // Predicated region
        $region37: #{tpu_custom_call.1} parent=35 // pred_check
          %p409 = pneg %p68
        $region38: #{tpu_custom_call.1} parent=35 // pred_check_branch
          %411 = sbr.rel (%p409) target = $region40
        $region39: #{tpu_custom_call.1} parent=35 // pred_region
          %s412 = sand.u32 %s53, 1
          %s413 = scalar_lea.sflag [#allocation4], %s412
          %s414 = sand.u32 %s53, 1
          %s415 = smul.addr %s414, 8
          %s416 = scalar_lea.vmem [#allocation5], %s415
          %417 = dma.done %s413, 128
        $region40: #{tpu_custom_call.1} parent=35 // pred_fallthru
          _
      $region36: #{tpu_custom_call.1} parent=5 // pred_fallthru
        _
    $region6: #{tpu_custom_call.1} parent=1 // loop_footer
      %s17 = sadd.s32 1, %s13
    $region7: #{tpu_custom_call.1} parent=1 // loop_footer_branch
      %12 = sbr.rel target = $region3
    $region8: #{tpu_custom_call.1} parent=1 // loop_exit
      _
    %418 = vsyncpa [#allocation3], 1
    %s419 = scalar_lea.sflag [#allocation3], 1
    %420 = vsyncpa %s419, 1
    %421 = vsyncpa [#allocation4], 1
    %s422 = scalar_lea.sflag [#allocation4], 1
    %423 = vsyncpa %s422, 1

</llo_original>
